<compile_context>
chip_gen: v6e
topology: v6e:2x2x1
jax: 0.10.0
libtpu: 0.0.40
codegen_flags: <defaults>
</compile_context>

<pallas_src>
import functools

import jax
import jax.numpy as jnp
from jax.experimental import pallas as pl
from jax.experimental.pallas import tpu as pltpu


def _round_up(x, m):
    return (x + m - 1) // m * m


# ---------------------------------------------------------------------------
# Pass 1: conv-as-matmul (bf16 MXU, f32 accumulation, resident weight) + BN
#         partial moments per M tile.
# ---------------------------------------------------------------------------
def _conv_moments_kernel(p_ref, w_ref, y_ref, mom_ref):
    # [TM, K] @ [K, C] on the MXU; K fits in one block, W stays VMEM-resident.
    y = jnp.dot(p_ref[...], w_ref[...], preferred_element_type=jnp.float32)
    y_ref[...] = y.astype(y_ref.dtype)                       # bf16 intermediate
    # Per-tile BN partial moments from the f32 result (before the downcast);
    # two direct sub-stores instead of a concat relayout.
    mom_ref[:, 0, :] = jnp.sum(y, axis=0, keepdims=True)
    mom_ref[:, 1, :] = jnp.sum(y * y, axis=0, keepdims=True)


# ---------------------------------------------------------------------------
# Pass 2: fused BatchNorm apply (pre-folded scale/shift) + LeakyReLU.
# ---------------------------------------------------------------------------
def _bn_lrelu_kernel(y_ref, scale_ref, shift_ref, o_ref, *, alpha):
    z = y_ref[...].astype(jnp.float32) * scale_ref[...] + shift_ref[...]
    o_ref[...] = jnp.where(z > 0, z, alpha * z)


def _pick_tm(m, k_pad, c_pad, *, vmem_budget=24 << 20):
    """Largest M-tile that fits the pass-1 VMEM budget; keeps >= 2 tiles when
    m allows (v7x megacore)."""
    if m <= 512:
        return _round_up(m, 16)
    tm = 256
    for cand in (1024, 512):
        est = ((2 * cand * k_pad            # patches, double-buffered bf16
                + 2 * k_pad * c_pad         # resident weight (x2 to be safe)
                + 2 * cand * c_pad) * 2     # y output, double-buffered bf16
               + 4 * 2 * c_pad * 4)         # moments, f32
        if m > cand and est <= vmem_budget:
            tm = cand
            break
    return tm


def _pick_pass2_rows(m_pad, tm, c_pad, *, max_rows=4096, vmem_budget=20 << 20):
    """Largest multiple of tm dividing m_pad that fits VMEM (double-buffered
    bf16 in + f32 out) and keeps >= 2 blocks when possible (v7x megacore)."""
    n_m = m_pad // tm
    best = tm
    for g in range(1, n_m + 1):
        if n_m % g:
            continue
        rows = tm * g
        if rows > max_rows or 2 * rows * c_pad * (2 + 4) > vmem_budget:
            continue
        if n_m >= 2 and n_m // g < 2:
            continue
        best = rows
    return best


def d_block_forward(x, weight, gamma, beta, *, stride=2, padding=1,
                    alpha=0.2, eps=1e-5, channels_last=False):
    """x: [N, ic, H, W]; weight: [oc, ic, kh, kw]; gamma/beta: [oc]."""
    n, ic, h, w = x.shape
    oc, _, kh, kw = weight.shape
    oh = (h + 2 * padding - kh) // stride + 1
    ow = (w + 2 * padding - kw) // stride + 1
    m = n * oh * ow
    kdim = ic * kh * kw

    # ---- glue: bf16 NHWC-ordered im2col (already in matmul order) ----
    # TODO(synk): fuse the im2col into pass 1 (memory_space=pl.ANY input +
    # manual strided-row DMAs) to remove the kh*kw-fold patches inflation.
    x_nhwc = jnp.transpose(x, (0, 2, 3, 1)).astype(jnp.bfloat16)      # [N,H,W,ic]
    xp = jnp.pad(x_nhwc, ((0, 0), (padding, padding), (padding, padding), (0, 0)))
    cols = []
    for di in range(kh):
        for dj in range(kw):
            cols.append(xp[:, di:di + stride * oh:stride,
                           dj:dj + stride * ow:stride, :])            # [N,OH,OW,ic]
    patches = jnp.stack(cols, axis=3).reshape(m, kh * kw * ic)        # [M, K] bf16
    # weight [oc, ic, kh, kw] -> [kh, kw, ic, oc] -> [K, oc] matching patch order
    w_flat = jnp.transpose(weight, (2, 3, 1, 0)).reshape(kdim, oc).astype(jnp.bfloat16)

    # ---- padding / tile selection (lane-dense last dims, single K block) ----
    # NOTE (v6e small-oc layers): padding oc up to 128 keeps stores lane-dense
    # at the cost of up to c_pad/oc extra output traffic; benchmark if oc << 128.
    c_pad = _round_up(oc, 128)
    k_pad = _round_up(kdim, 128)
    # TODO(synk): fall back to K-tiling with an f32 accumulator if the resident
    # bf16 weight (k_pad*c_pad*2 bytes) ever exceeds the VMEM budget.
    tm = _pick_tm(m, k_pad, c_pad)
    m_pad = _round_up(m, tm)
    n_m = m_pad // tm

    patches = jnp.pad(patches, ((0, m_pad - m), (0, k_pad - kdim)))
    w_flat = jnp.pad(w_flat, ((0, k_pad - kdim), (0, c_pad - oc)))

    # ---- pass 1: tiled matmul (resident W) + partial BN moments ----
    bytes_accessed = (patches.size * 2 + w_flat.size * 2
                      + m_pad * c_pad * 2 + n_m * 2 * c_pad * 4)
    y_conv, moments = pl.pallas_call(
        _conv_moments_kernel,
        out_shape=(jax.ShapeDtypeStruct((m_pad, c_pad), jnp.bfloat16),
                   jax.ShapeDtypeStruct((n_m, 2, c_pad), jnp.float32)),
        grid_spec=pltpu.PrefetchScalarGridSpec(
            num_scalar_prefetch=0,
            grid=(n_m,),
            in_specs=[pl.BlockSpec((tm, k_pad), lambda i: (i, 0)),
                      pl.BlockSpec((k_pad, c_pad), lambda i: (0, 0))],   # resident W
            out_specs=[pl.BlockSpec((tm, c_pad), lambda i: (i, 0)),
                       pl.BlockSpec((1, 2, c_pad), lambda i: (i, 0, 0))]),
        compiler_params=pltpu.CompilerParams(
            dimension_semantics=("parallel",),
            vmem_limit_bytes=32 * 1024 * 1024),
        cost_estimate=pl.CostEstimate(flops=2 * m_pad * k_pad * c_pad,
                                      transcendentals=0,
                                      bytes_accessed=bytes_accessed),
    )(patches, w_flat)

    # ---- glue: finalize BN stats (biased 1/M, PyTorch training-mode) and fold
    #      gamma/beta into a single scale/shift pair (f32 throughout).
    #      NOTE: E[y^2]-E[y]^2 in f32 sums; fine at DCGAN activation scales. ----
    tot = jnp.sum(moments, axis=0)                          # [2, C_pad]
    mean = tot[0] / m                                       # padded M rows are zero
    var = jnp.maximum(tot[1] / m - mean * mean, 0.0)
    inv_std = jax.lax.rsqrt(var + eps)
    gamma_p = jnp.pad(gamma.astype(jnp.float32), (0, c_pad - oc))   # padded ch -> 0
    beta_p = jnp.pad(beta.astype(jnp.float32), (0, c_pad - oc))
    scale = (gamma_p * inv_std).reshape(1, c_pad)
    shift = (beta_p - mean * gamma_p * inv_std).reshape(1, c_pad)

    # ---- pass 2: normalize + LeakyReLU (wide HBM-streaming row blocks) ----
    tm2 = _pick_pass2_rows(m_pad, tm, c_pad)
    out = pl.pallas_call(
        functools.partial(_bn_lrelu_kernel, alpha=alpha),
        out_shape=jax.ShapeDtypeStruct((m_pad, c_pad), jnp.float32),
        grid_spec=pltpu.PrefetchScalarGridSpec(
            num_scalar_prefetch=0,
            grid=(m_pad // tm2,),
            in_specs=[pl.BlockSpec((tm2, c_pad), lambda i: (i, 0)),
                      pl.BlockSpec((1, c_pad), lambda i: (0, 0)),
                      pl.BlockSpec((1, c_pad), lambda i: (0, 0))],
            out_specs=pl.BlockSpec((tm2, c_pad), lambda i: (i, 0))),
        compiler_params=pltpu.CompilerParams(
            dimension_semantics=("parallel",),
            vmem_limit_bytes=32 * 1024 * 1024),
    )(y_conv, scale, shift)

    # ---- glue: strip M/C padding; NCHW by default (module semantics) ----
    out = out[:m, :oc].reshape(n, oh, ow, oc)
    if channels_last:
        return out                      # chained D_blocks can skip the transpose
    return out.transpose(0, 3, 1, 2)


def _reference(x, weight, gamma, beta, *, stride=2, padding=1, alpha=0.2, eps=1e-5):
    y = jax.lax.conv_general_dilated(
        x.astype(jnp.float32), weight.astype(jnp.float32),
        window_strides=(stride, stride),
        padding=((padding, padding), (padding, padding)),
        dimension_numbers=("NCHW", "OIHW", "NCHW"),
        precision=jax.lax.Precision.HIGHEST)
    mean = jnp.mean(y, axis=(0, 2, 3), keepdims=True)
    var = jnp.mean((y - mean) ** 2, axis=(0, 2, 3), keepdims=True)
    y = (y - mean) * jax.lax.rsqrt(var + eps)
    y = y * gamma.reshape(1, -1, 1, 1) + beta.reshape(1, -1, 1, 1)
    return jnp.where(y > 0, y, alpha * y)


if __name__ == "__main__":
    # Small shapes consistent with the module (ic -> oc, spatial halved).
    N, IC, H, W = 2, 4, 16, 16
    OC, KSZ = 16, 4

    key = jax.random.PRNGKey(0)
    kx, kw_ = jax.random.split(key)
    x = jax.random.normal(kx, (N, IC, H, W), dtype=jnp.float32)
    weight = 0.05 * jax.random.normal(kw_, (OC, IC, KSZ, KSZ), dtype=jnp.float32)
    gamma = jnp.ones((OC,), jnp.float32)   # BatchNorm2d default affine init
    beta = jnp.zeros((OC,), jnp.float32)

    fwd = jax.jit(d_block_forward)
    out = jax.block_until_ready(fwd(x, weight, gamma, beta))
    assert out.shape == (N, OC, H // 2, W // 2), out.shape

    # Tight check: reference with the same bf16 input rounding (kernel uses
    # bf16 MXU inputs + a bf16-stored conv intermediate by design, so the
    # tolerance covers the bf16 rounding of the pre-BN activations).
    xb = x.astype(jnp.bfloat16).astype(jnp.float32)
    wb = weight.astype(jnp.bfloat16).astype(jnp.float32)
    err_tight = float(jnp.max(jnp.abs(out - _reference(xb, wb, gamma, beta))))
    assert err_tight < 2.5e-2, err_tight

    # Loose check: pure-f32 reference (bounds the intentional bf16 error).
    err_f32 = float(jnp.max(jnp.abs(out - _reference(x, weight, gamma, beta))))
    assert err_f32 < 6e-2, err_f32

    print("KERNEL_OK")
</pallas_src>

<mosaic_0001>
module attributes {stable_mosaic.version = 11 : i64} {
  func.func @_bn_lrelu_kernel(%arg0: i32, %arg1: memref<128x128xbf16, #tpu.memory_space<vmem>>, %arg2: memref<1x128xf32, #tpu.memory_space<vmem>>, %arg3: memref<1x128xf32, #tpu.memory_space<vmem>>, %arg4: memref<128x128xf32, #tpu.memory_space<vmem>>) attributes {dimension_semantics = [#tpu.dimension_semantics<parallel>], iteration_bounds = array<i64: 1>, scalar_prefetch = 0 : i64, scratch_operands = 0 : i64, tpu.core_type = #tpu.core_type<tc>, window_params = [{transform_indices = @transform_0, window_bounds = array<i64: 128, 128>}, {pipeline_mode = #tpu.pipeline_mode<synchronous>, transform_indices = @transform_1, window_bounds = array<i64: 1, 128>}, {pipeline_mode = #tpu.pipeline_mode<synchronous>, transform_indices = @transform_2, window_bounds = array<i64: 1, 128>}, {transform_indices = @transform_3, window_bounds = array<i64: 128, 128>}]} {
    %c0 = arith.constant 0 : index
    %c0_0 = arith.constant 0 : index
    %0 = vector.load %arg1[%c0, %c0_0] : memref<128x128xbf16, #tpu.memory_space<vmem>>, vector<128x128xbf16>
    %1 = arith.extf %0 : vector<128x128xbf16> to vector<128x128xf32>
    %c0_1 = arith.constant 0 : index
    %c0_2 = arith.constant 0 : index
    %2 = vector.load %arg2[%c0_1, %c0_2] : memref<1x128xf32, #tpu.memory_space<vmem>>, vector<1x128xf32>
    %3 = vector.broadcast %2 : vector<1x128xf32> to vector<128x128xf32>
    %4 = arith.mulf %1, %3 : vector<128x128xf32>
    %c0_3 = arith.constant 0 : index
    %c0_4 = arith.constant 0 : index
    %5 = vector.load %arg3[%c0_3, %c0_4] : memref<1x128xf32, #tpu.memory_space<vmem>>, vector<1x128xf32>
    %6 = vector.broadcast %5 : vector<1x128xf32> to vector<128x128xf32>
    %7 = arith.addf %4, %6 : vector<128x128xf32>
    %cst = arith.constant 0.000000e+00 : f32
    %8 = vector.broadcast %cst : f32 to vector<128x128xf32>
    %9 = arith.cmpf ogt, %7, %8 : vector<128x128xf32>
    %cst_5 = arith.constant 2.000000e-01 : f32
    %10 = vector.broadcast %cst_5 : f32 to vector<128x128xf32>
    %11 = arith.mulf %10, %7 : vector<128x128xf32>
    %12 = arith.select %9, %7, %11 : vector<128x128xi1>, vector<128x128xf32>
    %c0_6 = arith.constant 0 : index
    %c0_7 = arith.constant 0 : index
    %13 = vector.load %arg4[%c0_6, %c0_7] : memref<128x128xf32, #tpu.memory_space<vmem>>, vector<128x128xf32>
    tpu.vector_store %arg4[%c0_6, %c0_7], %12 {strides = array<i32>} : memref<128x128xf32, #tpu.memory_space<vmem>>, vector<128x128xf32>,
    return
  }
  func.func @transform_0(%arg0: i32) -> (i32, i32) {
    %c0_i32 = arith.constant 0 : i32
    %c0_i32_0 = arith.constant 0 : i32
    return %arg0, %c0_i32 : i32, i32
  }
  func.func @transform_1(%arg0: i32) -> (i32, i32) {
    %c0_i32 = arith.constant 0 : i32
    %c0_i32_0 = arith.constant 0 : i32
    %c0_i32_1 = arith.constant 0 : i32
    return %c0_i32, %c0_i32_0 : i32, i32
  }
  func.func @transform_2(%arg0: i32) -> (i32, i32) {
    %c0_i32 = arith.constant 0 : i32
    %c0_i32_0 = arith.constant 0 : i32
    %c0_i32_1 = arith.constant 0 : i32
    return %c0_i32, %c0_i32_0 : i32, i32
  }
  func.func @transform_3(%arg0: i32) -> (i32, i32) {
    %c0_i32 = arith.constant 0 : i32
    %c0_i32_0 = arith.constant 0 : i32
    return %arg0, %c0_i32 : i32, i32
  }
}

module attributes {stable_mosaic.version = 11 : i64} {
  func.func @_conv_moments_kernel(%arg0: i32, %arg1: memref<128x128xbf16, #tpu.memory_space<vmem>>, %arg2: memref<128x128xbf16, #tpu.memory_space<vmem>>, %arg3: memref<128x128xbf16, #tpu.memory_space<vmem>>, %arg4: memref<1x2x128xf32, #tpu.memory_space<vmem>>) attributes {dimension_semantics = [#tpu.dimension_semantics<parallel>], iteration_bounds = array<i64: 1>, scalar_prefetch = 0 : i64, scratch_operands = 0 : i64, tpu.core_type = #tpu.core_type<tc>, window_params = [{transform_indices = @transform_0, window_bounds = array<i64: 128, 128>}, {pipeline_mode = #tpu.pipeline_mode<synchronous>, transform_indices = @transform_1, window_bounds = array<i64: 128, 128>}, {transform_indices = @transform_2, window_bounds = array<i64: 128, 128>}, {transform_indices = @transform_3, window_bounds = array<i64: 1, 2, 128>}]} {
    %c0 = arith.constant 0 : index
    %c0_0 = arith.constant 0 : index
    %0 = vector.load %arg1[%c0, %c0_0] : memref<128x128xbf16, #tpu.memory_space<vmem>>, vector<128x128xbf16>
    %c0_1 = arith.constant 0 : index
    %c0_2 = arith.constant 0 : index
    %1 = vector.load %arg2[%c0_1, %c0_2] : memref<128x128xbf16, #tpu.memory_space<vmem>>, vector<128x128xbf16>
    %cst = arith.constant dense<0.000000e+00> : vector<128x128xf32>
    %2 = tpu.matmul %0, %1, %cst {dimension_numbers = #tpu.dot_dimension_numbers<[1], [0], [0], [1], [0, 0, 1, 1], [], []>} : vector<128x128xbf16>, vector<128x128xbf16>, vector<128x128xf32> -> vector<128x128xf32>
    %3 = arith.truncf %2 : vector<128x128xf32> to vector<128x128xbf16>
    %c0_3 = arith.constant 0 : index
    %c0_4 = arith.constant 0 : index
    %4 = vector.load %arg3[%c0_3, %c0_4] : memref<128x128xbf16, #tpu.memory_space<vmem>>, vector<128x128xbf16>
    tpu.vector_store %arg3[%c0_3, %c0_4], %3 {strides = array<i32>} : memref<128x128xbf16, #tpu.memory_space<vmem>>, vector<128x128xbf16>,
    %cst_5 = arith.constant dense<0.000000e+00> : vector<128xf32>
    %5 = vector.multi_reduction <add>, %2, %cst_5 [0] : vector<128x128xf32> to vector<128xf32>
    %6 = vector.shape_cast %5 : vector<128xf32> to vector<1x128xf32>
    %c0_6 = arith.constant 0 : index
    %c0_7 = arith.constant 0 : index
    %c0_8 = arith.constant 0 : index
    %7 = vector.load %arg4[%c0_6, %c0_7, %c0_8] : memref<1x2x128xf32, #tpu.memory_space<vmem>>, vector<1x1x128xf32>
    %8 = vector.shape_cast %7 : vector<1x1x128xf32> to vector<1x128xf32>
    %9 = vector.shape_cast %6 : vector<1x128xf32> to vector<1x1x128xf32>
    tpu.vector_store %arg4[%c0_6, %c0_7, %c0_8], %9 {strides = array<i32>} : memref<1x2x128xf32, #tpu.memory_space<vmem>>, vector<1x1x128xf32>,
    %10 = arith.mulf %2, %2 : vector<128x128xf32>
    %cst_9 = arith.constant dense<0.000000e+00> : vector<128xf32>
    %11 = vector.multi_reduction <add>, %10, %cst_9 [0] : vector<128x128xf32> to vector<128xf32>
    %12 = vector.shape_cast %11 : vector<128xf32> to vector<1x128xf32>
    %c0_10 = arith.constant 0 : index
    %c1 = arith.constant 1 : index
    %c0_11 = arith.constant 0 : index
    %13 = vector.load %arg4[%c0_10, %c1, %c0_11] : memref<1x2x128xf32, #tpu.memory_space<vmem>>, vector<1x1x128xf32>
    %14 = vector.shape_cast %13 : vector<1x1x128xf32> to vector<1x128xf32>
    %15 = vector.shape_cast %12 : vector<1x128xf32> to vector<1x1x128xf32>
    tpu.vector_store %arg4[%c0_10, %c1, %c0_11], %15 {strides = array<i32>} : memref<1x2x128xf32, #tpu.memory_space<vmem>>, vector<1x1x128xf32>,
    return
  }
  func.func @transform_0(%arg0: i32) -> (i32, i32) {
    %c0_i32 = arith.constant 0 : i32
    %c0_i32_0 = arith.constant 0 : i32
    return %arg0, %c0_i32 : i32, i32
  }
  func.func @transform_1(%arg0: i32) -> (i32, i32) {
    %c0_i32 = arith.constant 0 : i32
    %c0_i32_0 = arith.constant 0 : i32
    %c0_i32_1 = arith.constant 0 : i32
    return %c0_i32, %c0_i32_0 : i32, i32
  }
  func.func @transform_2(%arg0: i32) -> (i32, i32) {
    %c0_i32 = arith.constant 0 : i32
    %c0_i32_0 = arith.constant 0 : i32
    return %arg0, %c0_i32 : i32, i32
  }
  func.func @transform_3(%arg0: i32) -> (i32, i32, i32) {
    %c0_i32 = arith.constant 0 : i32
    %c0_i32_0 = arith.constant 0 : i32
    %c0_i32_1 = arith.constant 0 : i32
    return %arg0, %c0_i32, %c0_i32_0 : i32, i32, i32
  }
}

</mosaic_0001>

<llo_original>
// kernel: d_block_forward.3
$region0: #{d_block_forward.3}
  #allocation0 [shape = 'u32[]', space=smem, size = 0x4, offset = 0x4, fixed_abs, tag = 'smem constant byte address 0x4 - core index']
  #allocation1 [shape = 'u32[144,128]{1,0:T(1,128)}', space=vmem, size = 0x12000, scoped, tag = 'internal scratch']
  %s0 = inlined_call_operand.vmem [shape: bf16[128,128], index: 0, kind: input, shape index: {}]
  %s1 = inlined_call_operand.vmem [shape: f32[1,128], index: 1, kind: input, shape index: {}]
  %s2 = inlined_call_operand.vmem [shape: f32[1,128], index: 2, kind: input, shape index: {}]
  %s3 = inlined_call_operand.hbm [shape: f32[128,128], index: 3, kind: output, shape index: {}]
  %s4 = sld [smem:[#allocation0]]
  $region22: #{d_block_forward.3} parent=0
    _
  %s6 = ssub.s32 1, %s4
  %s7 = scalar_select 0, %s6, %s4
  $region1: #{d_block_forward.3} parent=0
    #allocation2 [shape = 'u8[65536]{0}', space=vmem, size = 0x10000, scoped, tag = 'output window, operand 0, single buffered']
    #allocation3 [shape = 's32[1]{0}', space=sflag, size = 0x4, scoped, tag = 'scoped memory for d_block_forward.3']
    %8 = vsyncpa [#allocation3], 0
    // Predicated region
    $region2: #{d_block_forward.3} parent=1 // pred_check
      _
    $region3: #{d_block_forward.3} parent=1 // pred_check_branch
      %10 = sbr.rel (0) target = $region5
    $region4: #{d_block_forward.3} parent=1 // pred_region
      _
    $region5: #{d_block_forward.3} parent=1 // pred_fallthru
      _
    // Predicated region
    $region6: #{d_block_forward.3} parent=1 // pred_check
      _
    $region7: #{d_block_forward.3} parent=1 // pred_check_branch
      %12 = sbr.rel (0) target = $region9
    $region8: #{d_block_forward.3} parent=1 // pred_region
      _
    $region9: #{d_block_forward.3} parent=1 // pred_fallthru
      _
    // Predicated region
    $region10: #{d_block_forward.3} parent=1 // pred_check
      _
    $region11: #{d_block_forward.3} parent=1 // pred_check_branch
      %14 = sbr.rel (0) target = $region13
    $region12: #{d_block_forward.3} parent=1 // pred_region
      _
    $region13: #{d_block_forward.3} parent=1 // pred_fallthru
      _
    %v15 = vld [vmem:[%s0] sm:$0xf]
    %v16 = vld [vmem:[%s0 + $0x4] sm:$0xf]
    %v17 = vld [vmem:[%s0 + $0x8] sm:$0xf]
    %v18 = vld [vmem:[%s0 + $0xc] sm:$0xf]
    %v19 = vld [vmem:[%s0 + $0x10] sm:$0xf]
    %v20 = vld [vmem:[%s0 + $0x14] sm:$0xf]
    %v21 = vld [vmem:[%s0 + $0x18] sm:$0xf]
    %v22 = vld [vmem:[%s0 + $0x1c] sm:$0xf]
    %v23 = vld [vmem:[%s0 + $0x20] sm:$0xf]
    %v24 = vld [vmem:[%s0 + $0x24] sm:$0xf]
    %v25 = vld [vmem:[%s0 + $0x28] sm:$0xf]
    %v26 = vld [vmem:[%s0 + $0x2c] sm:$0xf]
    %v27 = vld [vmem:[%s0 + $0x30] sm:$0xf]
    %v28 = vld [vmem:[%s0 + $0x34] sm:$0xf]
    %v29 = vld [vmem:[%s0 + $0x38] sm:$0xf]
    %v30 = vld [vmem:[%s0 + $0x3c] sm:$0xf]
    %v31 = vunpack.c.l.bf16 %v15
    %v32 = vunpack.c.l.bf16 %v16
    %v33 = vunpack.c.l.bf16 %v17
    %v34 = vunpack.c.l.bf16 %v18
    %v35 = vunpack.c.l.bf16 %v19
    %v36 = vunpack.c.l.bf16 %v20
    %v37 = vunpack.c.l.bf16 %v21
    %v38 = vunpack.c.l.bf16 %v22
    %v39 = vunpack.c.l.bf16 %v23
    %v40 = vunpack.c.l.bf16 %v24
    %v41 = vunpack.c.l.bf16 %v25
    %v42 = vunpack.c.l.bf16 %v26
    %v43 = vunpack.c.l.bf16 %v27
    %v44 = vunpack.c.l.bf16 %v28
    %v45 = vunpack.c.l.bf16 %v29
    %v46 = vunpack.c.l.bf16 %v30
    %v47 = vld [vmem:[%s1] sm:$0x1]
    %v49 = vlaneseq
    %v50 = vshrl.u32 %v49, 7
    %v51 = vsub.s32 0, %v50
    %v52 = vrot.slane %v47, %v51
    %v54 = vmul.f32 %v31, %v52
    %v55 = vmul.f32 %v32, %v52
    %v56 = vmul.f32 %v33, %v52
    %v57 = vmul.f32 %v34, %v52
    %v58 = vmul.f32 %v35, %v52
    %v59 = vmul.f32 %v36, %v52
    %v60 = vmul.f32 %v37, %v52
    %v61 = vmul.f32 %v38, %v52
    %v62 = vmul.f32 %v39, %v52
    %v63 = vmul.f32 %v40, %v52
    %v64 = vmul.f32 %v41, %v52
    %v65 = vmul.f32 %v42, %v52
    %v66 = vmul.f32 %v43, %v52
    %v67 = vmul.f32 %v44, %v52
    %v68 = vmul.f32 %v45, %v52
    %v69 = vmul.f32 %v46, %v52
    %v70 = vld [vmem:[%s2] sm:$0x1]
    %v72 = vlaneseq
    %v73 = vshrl.u32 %v72, 7
    %v74 = vsub.s32 0, %v73
    %v75 = vrot.slane %v70, %v74
    %v77 = vadd.f32 %v54, %v75
    %v78 = vadd.f32 %v55, %v75
    %v79 = vadd.f32 %v56, %v75
    %v80 = vadd.f32 %v57, %v75
    %v81 = vadd.f32 %v58, %v75
    %v82 = vadd.f32 %v59, %v75
    %v83 = vadd.f32 %v60, %v75
    %v84 = vadd.f32 %v61, %v75
    %v85 = vadd.f32 %v62, %v75
    %v86 = vadd.f32 %v63, %v75
    %v87 = vadd.f32 %v64, %v75
    %v88 = vadd.f32 %v65, %v75
    %v89 = vadd.f32 %v66, %v75
    %v90 = vadd.f32 %v67, %v75
    %v91 = vadd.f32 %v68, %v75
    %v92 = vadd.f32 %v69, %v75
    %vm93 = vcmp.gt.f32.partialorder %v77, 0.0
    %vm94 = vcmp.gt.f32.partialorder %v78, 0.0
    %vm95 = vcmp.gt.f32.partialorder %v79, 0.0
    %vm96 = vcmp.gt.f32.partialorder %v80, 0.0
    %vm97 = vcmp.gt.f32.partialorder %v81, 0.0
    %vm98 = vcmp.gt.f32.partialorder %v82, 0.0
    %vm99 = vcmp.gt.f32.partialorder %v83, 0.0
    %vm100 = vcmp.gt.f32.partialorder %v84, 0.0
    %vm101 = vcmp.gt.f32.partialorder %v85, 0.0
    %vm102 = vcmp.gt.f32.partialorder %v86, 0.0
    %vm103 = vcmp.gt.f32.partialorder %v87, 0.0
    %vm104 = vcmp.gt.f32.partialorder %v88, 0.0
    %vm105 = vcmp.gt.f32.partialorder %v89, 0.0
    %vm106 = vcmp.gt.f32.partialorder %v90, 0.0
    %vm107 = vcmp.gt.f32.partialorder %v91, 0.0
    %vm108 = vcmp.gt.f32.partialorder %v92, 0.0
    %v109 = vmul.f32 %v77, 0.2
    %v110 = vmul.f32 %v78, 0.2
    %v111 = vmul.f32 %v79, 0.2
    %v112 = vmul.f32 %v80, 0.2
    %v113 = vmul.f32 %v81, 0.2
    %v114 = vmul.f32 %v82, 0.2
    %v115 = vmul.f32 %v83, 0.2
    %v116 = vmul.f32 %v84, 0.2
    %v117 = vmul.f32 %v85, 0.2
    %v118 = vmul.f32 %v86, 0.2
    %v119 = vmul.f32 %v87, 0.2
    %v120 = vmul.f32 %v88, 0.2
    %v121 = vmul.f32 %v89, 0.2
    %v122 = vmul.f32 %v90, 0.2
    %v123 = vmul.f32 %v91, 0.2
    %v124 = vmul.f32 %v92, 0.2
    %v125 = vsel %vm93, %v77, %v109
    %v126 = vsel %vm94, %v78, %v110
    %v127 = vsel %vm95, %v79, %v111
    %v128 = vsel %vm96, %v80, %v112
    %v129 = vsel %vm97, %v81, %v113
    %v130 = vsel %vm98, %v82, %v114
    %v131 = vsel %vm99, %v83, %v115
    %v132 = vsel %vm100, %v84, %v116
    %v133 = vsel %vm101, %v85, %v117
    %v134 = vsel %vm102, %v86, %v118
    %v135 = vsel %vm103, %v87, %v119
    %v136 = vsel %vm104, %v88, %v120
    %v137 = vsel %vm105, %v89, %v121
    %v138 = vsel %vm106, %v90, %v122
    %v139 = vsel %vm107, %v91, %v123
    %v140 = vsel %vm108, %v92, %v124
    %141 = vst [vmem:[#allocation2] sm:$0xff] %v125
    %142 = vst [vmem:[#allocation2 + $0x8] sm:$0xff] %v126
    %143 = vst [vmem:[#allocation2 + $0x10] sm:$0xff] %v127
    %144 = vst [vmem:[#allocation2 + $0x18] sm:$0xff] %v128
    %145 = vst [vmem:[#allocation2 + $0x20] sm:$0xff] %v129
    %146 = vst [vmem:[#allocation2 + $0x28] sm:$0xff] %v130
    %147 = vst [vmem:[#allocation2 + $0x30] sm:$0xff] %v131
    %148 = vst [vmem:[#allocation2 + $0x38] sm:$0xff] %v132
    %149 = vst [vmem:[#allocation2 + $0x40] sm:$0xff] %v133
    %150 = vst [vmem:[#allocation2 + $0x48] sm:$0xff] %v134
    %151 = vst [vmem:[#allocation2 + $0x50] sm:$0xff] %v135
    %152 = vst [vmem:[#allocation2 + $0x58] sm:$0xff] %v136
    %153 = vst [vmem:[#allocation2 + $0x60] sm:$0xff] %v137
    %154 = vst [vmem:[#allocation2 + $0x68] sm:$0xff] %v138
    %155 = vst [vmem:[#allocation2 + $0x70] sm:$0xff] %v139
    %156 = vst [vmem:[#allocation2 + $0x78] sm:$0xff] %v140
    // Predicated region
    $region14: #{d_block_forward.3} parent=1 // pred_check
      _
    $region15: #{d_block_forward.3} parent=1 // pred_check_branch
      %158 = sbr.rel (0) target = $region17
    $region16: #{d_block_forward.3} parent=1 // pred_region
      %s160 = ssub.s32 2048, 2048
      %161 = vsyncadd [#allocation3], %s160
      %s162 = sshll.u32 [#allocation2], 4
      %s163 = int_to_ptr.vmem [resolvable:$true] %s162
      %168 = dma.vmem_to_hbm [thread:$0]  %s163, 2048, %s3, [#allocation3], 128, 128, 8
    $region17: #{d_block_forward.3} parent=1 // pred_fallthru
      _
    // Predicated region
    $region18: #{d_block_forward.3} parent=1 // pred_check
      _
    $region19: #{d_block_forward.3} parent=1 // pred_check_branch
      %170 = sbr.rel (0) target = $region21
    $region20: #{d_block_forward.3} parent=1 // pred_region
      %171 = dma.done [#allocation3], 2048
    $region21: #{d_block_forward.3} parent=1 // pred_fallthru
      _
    %172 = vsyncpa [#allocation3], 1

// kernel: d_block_forward.2
$region0: #{d_block_forward.2}
  #allocation0 [shape = 'u32[]', space=smem, size = 0x4, offset = 0x4, fixed_abs, tag = 'smem constant byte address 0x4 - core index']
  #allocation1 [shape = 'u32[144,128]{1,0:T(1,128)}', space=vmem, size = 0x12000, scoped, tag = 'internal scratch']
  %s0 = inlined_call_operand.vmem [shape: bf16[128,128], index: 0, kind: input, shape index: {}]
  %s1 = inlined_call_operand.vmem [shape: bf16[128,128], index: 1, kind: input, shape index: {}]
  %s2 = inlined_call_operand.vmem [shape: bf16[128,128], index: 2, kind: output, shape index: {0}]
  %s3 = inlined_call_operand.vmem [shape: f32[1,2,128], index: 3, kind: output, shape index: {1}]
  %4 = xla_tuple %s2, %s3
  %s5 = sld [smem:[#allocation0]]
  $region26: #{d_block_forward.2} parent=0
    _
  %s7 = ssub.s32 1, %s5
  %s8 = scalar_select 0, %s7, %s5
  // Predicated region
  $region2: #{d_block_forward.2} parent=0 // pred_check
    _
  $region3: #{d_block_forward.2} parent=0 // pred_check_branch
    %10 = sbr.rel (0) target = $region5
  $region4: #{d_block_forward.2} parent=0 // pred_region
    _
  $region5: #{d_block_forward.2} parent=0 // pred_fallthru
    _
  // Predicated region
  $region6: #{d_block_forward.2} parent=0 // pred_check
    _
  $region7: #{d_block_forward.2} parent=0 // pred_check_branch
    %12 = sbr.rel (0) target = $region9
  $region8: #{d_block_forward.2} parent=0 // pred_region
    _
  $region9: #{d_block_forward.2} parent=0 // pred_fallthru
    _
  %v14 = vld [vmem:[%s0] sm:$0xf]
  %v15 = vld [vmem:[%s0 + $0x4] sm:$0xf]
  %v16 = vld [vmem:[%s0 + $0x8] sm:$0xf]
  %v17 = vld [vmem:[%s0 + $0xc] sm:$0xf]
  %v18 = vld [vmem:[%s0 + $0x10] sm:$0xf]
  %v19 = vld [vmem:[%s0 + $0x14] sm:$0xf]
  %v20 = vld [vmem:[%s0 + $0x18] sm:$0xf]
  %v21 = vld [vmem:[%s0 + $0x1c] sm:$0xf]
  %v22 = vld [vmem:[%s0 + $0x20] sm:$0xf]
  %v23 = vld [vmem:[%s0 + $0x24] sm:$0xf]
  %v24 = vld [vmem:[%s0 + $0x28] sm:$0xf]
  %v25 = vld [vmem:[%s0 + $0x2c] sm:$0xf]
  %v26 = vld [vmem:[%s0 + $0x30] sm:$0xf]
  %v27 = vld [vmem:[%s0 + $0x34] sm:$0xf]
  %v28 = vld [vmem:[%s0 + $0x38] sm:$0xf]
  %v29 = vld [vmem:[%s0 + $0x3c] sm:$0xf]
  %v30 = vld [vmem:[%s1] sm:$0xf]
  %v31 = vld [vmem:[%s1 + $0x4] sm:$0xf]
  %v32 = vld [vmem:[%s1 + $0x8] sm:$0xf]
  %v33 = vld [vmem:[%s1 + $0xc] sm:$0xf]
  %v34 = vld [vmem:[%s1 + $0x10] sm:$0xf]
  %v35 = vld [vmem:[%s1 + $0x14] sm:$0xf]
  %v36 = vld [vmem:[%s1 + $0x18] sm:$0xf]
  %v37 = vld [vmem:[%s1 + $0x1c] sm:$0xf]
  %v38 = vld [vmem:[%s1 + $0x20] sm:$0xf]
  %v39 = vld [vmem:[%s1 + $0x24] sm:$0xf]
  %v40 = vld [vmem:[%s1 + $0x28] sm:$0xf]
  %v41 = vld [vmem:[%s1 + $0x2c] sm:$0xf]
  %v42 = vld [vmem:[%s1 + $0x30] sm:$0xf]
  %v43 = vld [vmem:[%s1 + $0x34] sm:$0xf]
  %v44 = vld [vmem:[%s1 + $0x38] sm:$0xf]
  %v45 = vld [vmem:[%s1 + $0x3c] sm:$0xf]
  %v62 = vunpack.c.l.b16 %v14
  %v63 = vunpack.c.l.b16 %v15
  %v64 = vunpack.c.l.b16 %v16
  %v65 = vunpack.c.l.b16 %v17
  %v66 = vunpack.c.l.b16 %v18
  %v67 = vunpack.c.l.b16 %v19
  %v68 = vunpack.c.l.b16 %v20
  %v69 = vunpack.c.l.b16 %v21
  %v70 = vunpack.c.l.b16 %v22
  %v71 = vunpack.c.l.b16 %v23
  %v72 = vunpack.c.l.b16 %v24
  %v73 = vunpack.c.l.b16 %v25
  %v74 = vunpack.c.l.b16 %v26
  %v75 = vunpack.c.l.b16 %v27
  %v76 = vunpack.c.l.b16 %v28
  %v77 = vunpack.c.l.b16 %v29
  %v78 = vpack.c.b16 %v63, %v62
  %v79 = vpack.c.b16 %v65, %v64
  %v80 = vpack.c.b16 %v67, %v66
  %v81 = vpack.c.b16 %v69, %v68
  %v82 = vpack.c.b16 %v71, %v70
  %v83 = vpack.c.b16 %v73, %v72
  %v84 = vpack.c.b16 %v75, %v74
  %v85 = vpack.c.b16 %v77, %v76
  %v110 = vunpack.c.l.b16 %v30
  %v111 = vunpack.c.l.b16 %v31
  %v112 = vunpack.c.l.b16 %v32
  %v113 = vunpack.c.l.b16 %v33
  %v114 = vunpack.c.l.b16 %v34
  %v115 = vunpack.c.l.b16 %v35
  %v116 = vunpack.c.l.b16 %v36
  %v117 = vunpack.c.l.b16 %v37
  %v118 = vunpack.c.l.b16 %v38
  %v119 = vunpack.c.l.b16 %v39
  %v120 = vunpack.c.l.b16 %v40
  %v121 = vunpack.c.l.b16 %v41
  %v122 = vunpack.c.l.b16 %v42
  %v123 = vunpack.c.l.b16 %v43
  %v124 = vunpack.c.l.b16 %v44
  %v125 = vunpack.c.l.b16 %v45
  %v126 = vpack.c.b16 %v111, %v110
  %v127 = vpack.c.b16 %v113, %v112
  %v128 = vpack.c.b16 %v115, %v114
  %v129 = vpack.c.b16 %v117, %v116
  %v130 = vpack.c.b16 %v119, %v118
  %v131 = vpack.c.b16 %v121, %v120
  %v132 = vpack.c.b16 %v123, %v122
  %v133 = vpack.c.b16 %v125, %v124
  %142 = vmatprep.subr.bf16.mxu0 0
  %143 = vmatpush1.bf16.msra.mxu0 %v133
  %144 = vmatprep.subr.bf16.mxu0 0
  %145 = vmatpush1.bf16.msra.mxu0 %v132
  %146 = vmatprep.subr.bf16.mxu0 0
  %147 = vmatpush1.bf16.msra.mxu0 %v131
  %148 = vmatprep.subr.bf16.mxu0 0
  %149 = vmatpush1.bf16.msra.mxu0 %v130
  %150 = vmatprep.subr.bf16.mxu0 0
  %151 = vmatpush1.bf16.msra.mxu0 %v129
  %152 = vmatprep.subr.bf16.mxu0 0
  %153 = vmatpush1.bf16.msra.mxu0 %v128
  %154 = vmatprep.subr.bf16.mxu0 0
  %155 = vmatpush1.bf16.msra.mxu0 %v127
  %156 = vmatprep.subr.bf16.mxu0 0
  %157 = vmatpush1.bf16.msra.mxu0 %v126
  %158 = vmatprep.subr.bf16.mxu0 0
  %159 = vmatpush2.bf16.msra.mxu0 0
  %160 = vmatprep.subr.bf16.mxu0 0
  %161 = vmatpush2.bf16.msra.mxu0 0
  %162 = vmatprep.subr.bf16.mxu0 0
  %163 = vmatpush2.bf16.msra.mxu0 0
  %164 = vmatprep.subr.bf16.mxu0 0
  %165 = vmatpush2.bf16.msra.mxu0 0
  %166 = vmatprep.subr.bf16.mxu0 0
  %167 = vmatpush2.bf16.msra.mxu0 0
  %168 = vmatprep.subr.bf16.mxu0 0
  %169 = vmatpush2.bf16.msra.mxu0 0
  %170 = vmatprep.subr.bf16.mxu0 0
  %171 = vmatpush2.bf16.msra.mxu0 0
  %172 = vmatprep.subr.bf16.mxu0 0
  %173 = vmatpush2.bf16.msra.mxu0 0
  %174 = vmatprep.mubr.bf16.mxu0 0
  %175 = vmatmul.mubr.bf16.gmra.mxu0 %v78
  %v176 = vpop.f32.mrf.mxu0
  %v177 = vadd.f32 0.0, %v176
  %v178 = vpop.f32.mrf.mxu0
  %v179 = vpop.f32.mrf.mxu0
  %v180 = vadd.f32 0.0, %v179
  %v181 = vpop.f32.mrf.mxu0
  %182 = vmatprep.mubr.bf16.mxu0 0
  %183 = vmatmul.mubr.bf16.gmra.mxu0 %v79
  %v184 = vpop.f32.mrf.mxu0
  %v185 = vadd.f32 0.0, %v184
  %v186 = vpop.f32.mrf.mxu0
  %v187 = vpop.f32.mrf.mxu0
  %v188 = vadd.f32 0.0, %v187
  %v189 = vpop.f32.mrf.mxu0
  %190 = vmatprep.mubr.bf16.mxu0 0
  %191 = vmatmul.mubr.bf16.gmra.mxu0 %v80
  %v192 = vpop.f32.mrf.mxu0
  %v193 = vadd.f32 0.0, %v192
  %v194 = vpop.f32.mrf.mxu0
  %v195 = vpop.f32.mrf.mxu0
  %v196 = vadd.f32 0.0, %v195
  %v197 = vpop.f32.mrf.mxu0
  %198 = vmatprep.mubr.bf16.mxu0 0
  %199 = vmatmul.mubr.bf16.gmra.mxu0 %v81
  %v200 = vpop.f32.mrf.mxu0
  %v201 = vadd.f32 0.0, %v200
  %v202 = vpop.f32.mrf.mxu0
  %v203 = vpop.f32.mrf.mxu0
  %v204 = vadd.f32 0.0, %v203
  %v205 = vpop.f32.mrf.mxu0
  %206 = vmatprep.mubr.bf16.mxu0 0
  %207 = vmatmul.mubr.bf16.gmra.mxu0 %v82
  %v208 = vpop.f32.mrf.mxu0
  %v209 = vadd.f32 0.0, %v208
  %v210 = vpop.f32.mrf.mxu0
  %v211 = vpop.f32.mrf.mxu0
  %v212 = vadd.f32 0.0, %v211
  %v213 = vpop.f32.mrf.mxu0
  %214 = vmatprep.mubr.bf16.mxu0 0
  %215 = vmatmul.mubr.bf16.gmra.mxu0 %v83
  %v216 = vpop.f32.mrf.mxu0
  %v217 = vadd.f32 0.0, %v216
  %v218 = vpop.f32.mrf.mxu0
  %v219 = vpop.f32.mrf.mxu0
  %v220 = vadd.f32 0.0, %v219
  %v221 = vpop.f32.mrf.mxu0
  %222 = vmatprep.mubr.bf16.mxu0 0
  %223 = vmatmul.mubr.bf16.gmra.mxu0 %v84
  %v224 = vpop.f32.mrf.mxu0
  %v225 = vadd.f32 0.0, %v224
  %v226 = vpop.f32.mrf.mxu0
  %v227 = vpop.f32.mrf.mxu0
  %v228 = vadd.f32 0.0, %v227
  %v229 = vpop.f32.mrf.mxu0
  %230 = vmatprep.mubr.bf16.mxu0 0
  %231 = vmatmul.mubr.bf16.gmra.mxu0 %v85
  %v232 = vpop.f32.mrf.mxu0
  %v233 = vadd.f32 0.0, %v232
  %v234 = vpop.f32.mrf.mxu0
  %v235 = vpop.f32.mrf.mxu0
  %v236 = vadd.f32 0.0, %v235
  %v237 = vpop.f32.mrf.mxu0
  %238 = vdwg.mxu0
  %v239 = vpack.c.bf16 %v180, %v177
  %v240 = vpack.c.bf16 %v188, %v185
  %v241 = vpack.c.bf16 %v196, %v193
  %v242 = vpack.c.bf16 %v204, %v201
  %v243 = vpack.c.bf16 %v212, %v209
  %v244 = vpack.c.bf16 %v220, %v217
  %v245 = vpack.c.bf16 %v228, %v225
  %v246 = vpack.c.bf16 %v236, %v233
  %v255 = vunpack.c.l.b16 %v239
  %v256 = vunpack.c.h.b16 %v239
  %v257 = vunpack.c.l.b16 %v240
  %v258 = vunpack.c.h.b16 %v240
  %v259 = vunpack.c.l.b16 %v241
  %v260 = vunpack.c.h.b16 %v241
  %v261 = vunpack.c.l.b16 %v242
  %v262 = vunpack.c.h.b16 %v242
  %v263 = vunpack.c.l.b16 %v243
  %v264 = vunpack.c.h.b16 %v243
  %v265 = vunpack.c.l.b16 %v244
  %v266 = vunpack.c.h.b16 %v244
  %v267 = vunpack.c.l.b16 %v245
  %v268 = vunpack.c.h.b16 %v245
  %v269 = vunpack.c.l.b16 %v246
  %v270 = vunpack.c.h.b16 %v246
  %v271 = vpack.c.b16 %v255, %v255
  %v272 = vpack.c.b16 %v256, %v256
  %v273 = vpack.c.b16 %v257, %v257
  %v274 = vpack.c.b16 %v258, %v258
  %v275 = vpack.c.b16 %v259, %v259
  %v276 = vpack.c.b16 %v260, %v260
  %v277 = vpack.c.b16 %v261, %v261
  %v278 = vpack.c.b16 %v262, %v262
  %v279 = vpack.c.b16 %v263, %v263
  %v280 = vpack.c.b16 %v264, %v264
  %v281 = vpack.c.b16 %v265, %v265
  %v282 = vpack.c.b16 %v266, %v266
  %v283 = vpack.c.b16 %v267, %v267
  %v284 = vpack.c.b16 %v268, %v268
  %v285 = vpack.c.b16 %v269, %v269
  %v286 = vpack.c.b16 %v270, %v270
  %303 = vst [vmem:[%s2] sm:$0xf] %v271
  %304 = vst [vmem:[%s2 + $0x4] sm:$0xf] %v272
  %305 = vst [vmem:[%s2 + $0x8] sm:$0xf] %v273
  %306 = vst [vmem:[%s2 + $0xc] sm:$0xf] %v274
  %307 = vst [vmem:[%s2 + $0x10] sm:$0xf] %v275
  %308 = vst [vmem:[%s2 + $0x14] sm:$0xf] %v276
  %309 = vst [vmem:[%s2 + $0x18] sm:$0xf] %v277
  %310 = vst [vmem:[%s2 + $0x1c] sm:$0xf] %v278
  %311 = vst [vmem:[%s2 + $0x20] sm:$0xf] %v279
  %312 = vst [vmem:[%s2 + $0x24] sm:$0xf] %v280
  %313 = vst [vmem:[%s2 + $0x28] sm:$0xf] %v281
  %314 = vst [vmem:[%s2 + $0x2c] sm:$0xf] %v282
  %315 = vst [vmem:[%s2 + $0x30] sm:$0xf] %v283
  %316 = vst [vmem:[%s2 + $0x34] sm:$0xf] %v284
  %317 = vst [vmem:[%s2 + $0x38] sm:$0xf] %v285
  %318 = vst [vmem:[%s2 + $0x3c] sm:$0xf] %v286
  %v319 = vadd.f32 %v177, %v180
  %v320 = vadd.f32 %v319, %v185
  %v321 = vadd.f32 %v320, %v188
  %v322 = vadd.f32 %v321, %v193
  %v323 = vadd.f32 %v322, %v196
  %v324 = vadd.f32 %v323, %v201
  %v325 = vadd.f32 %v324, %v204
  %v326 = vadd.f32 %v325, %v209
  %v327 = vadd.f32 %v326, %v212
  %v328 = vadd.f32 %v327, %v217
  %v329 = vadd.f32 %v328, %v220
  %v330 = vadd.f32 %v329, %v225
  %v331 = vadd.f32 %v330, %v228
  %v332 = vadd.f32 %v331, %v233
  %v333 = vadd.f32 %v332, %v236
  %v334 = vrot.slane %v333, 4
  %v335 = vadd.f32 %v333, %v334
  %v336 = vrot.slane %v335, 2
  %v337 = vadd.f32 %v335, %v336
  %v338 = vrot.slane %v337, 1
  %v339 = vadd.f32 %v337, %v338
  %340 = vst [vmem:[%s3] sm:$0x1] %v339
  %v341 = vmul.f32 %v177, %v177
  %v342 = vmul.f32 %v180, %v180
  %v343 = vmul.f32 %v185, %v185
  %v344 = vmul.f32 %v188, %v188
  %v345 = vmul.f32 %v193, %v193
  %v346 = vmul.f32 %v196, %v196
  %v347 = vmul.f32 %v201, %v201
  %v348 = vmul.f32 %v204, %v204
  %v349 = vmul.f32 %v209, %v209
  %v350 = vmul.f32 %v212, %v212
  %v351 = vmul.f32 %v217, %v217
  %v352 = vmul.f32 %v220, %v220
  %v353 = vmul.f32 %v225, %v225
  %v354 = vmul.f32 %v228, %v228
  %v355 = vmul.f32 %v233, %v233
  %v356 = vmul.f32 %v236, %v236
  %v357 = vadd.f32 %v341, %v342
  %v358 = vadd.f32 %v357, %v343
  %v359 = vadd.f32 %v358, %v344
  %v360 = vadd.f32 %v359, %v345
  %v361 = vadd.f32 %v360, %v346
  %v362 = vadd.f32 %v361, %v347
  %v363 = vadd.f32 %v362, %v348
  %v364 = vadd.f32 %v363, %v349
  %v365 = vadd.f32 %v364, %v350
  %v366 = vadd.f32 %v365, %v351
  %v367 = vadd.f32 %v366, %v352
  %v368 = vadd.f32 %v367, %v353
  %v369 = vadd.f32 %v368, %v354
  %v370 = vadd.f32 %v369, %v355
  %v371 = vadd.f32 %v370, %v356
  %v372 = vrot.slane %v371, 4
  %v373 = vadd.f32 %v371, %v372
  %v374 = vrot.slane %v373, 2
  %v375 = vadd.f32 %v373, %v374
  %v376 = vrot.slane %v375, 1
  %v377 = vadd.f32 %v375, %v376
  %378 = vst [vmem:[%s3 + $0x1] sm:$0x1] %v377
  // Predicated region
  $region10: #{d_block_forward.2} parent=0 // pred_check
    _
  $region11: #{d_block_forward.2} parent=0 // pred_check_branch
    %380 = sbr.rel (0) target = $region13
  $region12: #{d_block_forward.2} parent=0 // pred_region
    _
  $region13: #{d_block_forward.2} parent=0 // pred_fallthru
    _
  // Predicated region
  $region14: #{d_block_forward.2} parent=0 // pred_check
    _
  $region15: #{d_block_forward.2} parent=0 // pred_check_branch
    %382 = sbr.rel (0) target = $region17
  $region16: #{d_block_forward.2} parent=0 // pred_region
    _
  $region17: #{d_block_forward.2} parent=0 // pred_fallthru
    _
  // Predicated region
  $region18: #{d_block_forward.2} parent=0 // pred_check
    _
  $region19: #{d_block_forward.2} parent=0 // pred_check_branch
    %384 = sbr.rel (0) target = $region21
  $region20: #{d_block_forward.2} parent=0 // pred_region
    _
  $region21: #{d_block_forward.2} parent=0 // pred_fallthru
    _
  // Predicated region
  $region22: #{d_block_forward.2} parent=0 // pred_check
    _
  $region23: #{d_block_forward.2} parent=0 // pred_check_branch
    %386 = sbr.rel (0) target = $region25
  $region24: #{d_block_forward.2} parent=0 // pred_region
    _
  $region25: #{d_block_forward.2} parent=0 // pred_fallthru
    _

</llo_original>
